<compile_context>
chip_gen: v5e
topology: v5e:2x2
jax: 0.10.0
libtpu: 0.0.40
codegen_flags: <defaults>
</compile_context>

<pallas_src>
import functools

import jax
import jax.numpy as jnp
from jax.experimental import pallas as pl
from jax.experimental.pallas import tpu as pltpu

OUT_C = 128  # both branches project to 128 channels


def _round_up(x, m):
    return ((x + m - 1) // m) * m


def _round_down(x, m):
    return (x // m) * m


def _vmem_capacity_bytes():
    """Physical VMEM per TensorCore; conservative fallback if the query fails."""
    try:
        info = pltpu.get_tpu_info()
        for attr in ("vmem_capacity_bytes", "vmem_bytes", "vmem_size_bytes"):
            v = getattr(info, attr, None)
            if v:
                return int(v)
    except Exception:
        pass
    return 64 * 1024 * 1024  # v7x per-TC value (smallest current generation)


def lite_raspp_kernel(x_ref, w_ref, shift_ref, o_ref, *, matmul_dtype):
    # x_ref:     (C, TILE_HW)   f32 spatial tile of one batch element (NCHW-native)
    # w_ref:     (128, C)       per-batch weight: w1 * bn_scale * gate_n  (matmul dtype)
    # shift_ref: (128, 1)       per-batch shift:  bn_shift * gate_n       (f32)
    # o_ref:     (128, TILE_HW)
    x = x_ref[...].astype(matmul_dtype)  # in-kernel cast: free VPU filler, no extra HBM pass
    y = jnp.dot(w_ref[...], x, preferred_element_type=jnp.float32)
    # Gate > 0 (sigmoid) so ReLU commutes with it; gate is pre-folded into w/shift,
    # leaving a single add + ReLU epilogue.
    o_ref[...] = jnp.maximum(y + shift_ref[...], 0.0).astype(o_ref.dtype)


def lite_raspp(x_nchw, w1, bn_gamma, bn_beta, bn_mean, bn_var, w2, b2,
               eps=1e-5, matmul_dtype=jnp.bfloat16, out_dtype=jnp.float32,
               pooled=None):
    """x_nchw: (N, C, H, W). Returns (N, 128, H, W) in `out_dtype`."""
    N, C, H, W = x_nchw.shape
    HW = H * W
    # NCHW -> (N, C, HW) is a pure reshape: no HBM data movement.
    x = x_nchw.astype(jnp.float32).reshape(N, C, HW)

    # ---- branch2 (tiny: O(N*C + N*128)) hoisted out of the kernel ----------
    # TODO(synk): accept precomputed per-channel means from the producer of x
    # (via `pooled=`) to skip this extra full pass over x.
    if pooled is None:
        pooled = jnp.mean(x, axis=2)                                    # (N, C)
    w2_mat = w2.reshape(OUT_C, C).astype(jnp.float32)                   # (128, C)
    gate = jax.nn.sigmoid(pooled @ w2_mat.T + b2.reshape(1, OUT_C))     # (N, 128)

    # ---- fold BN (eval mode) and the strictly-positive gate into w / shift --
    scale = bn_gamma / jnp.sqrt(bn_var + eps)                           # (128,)
    shift = bn_beta - bn_mean * scale                                   # (128,)
    w1_t = w1.reshape(OUT_C, C).astype(jnp.float32) * scale[:, None]    # (128, C)
    w_gated = (gate[:, :, None] * w1_t[None, :, :]).astype(matmul_dtype)      # (N,128,C)
    shift_gated = (gate * shift[None, :]).reshape(N, OUT_C, 1).astype(jnp.float32)

    # ---- spatial tiling: VMEM-budgeted, lane-dense NCHW-native blocks -------
    out_itemsize = jnp.dtype(out_dtype).itemsize
    w_itemsize = jnp.dtype(matmul_dtype).itemsize
    vmem_cap = _vmem_capacity_bytes()
    budget = int(vmem_cap * 0.6)                           # headroom for Mosaic scratch
    fixed = 2 * (OUT_C * C * w_itemsize + OUT_C * 4)       # double-buffered weight + shift
    per_col = 2 * (C * 4 + OUT_C * out_itemsize)           # double-buffered x + out per column
    tile_cap = max(128, _round_down(max(budget - fixed, per_col * 128) // per_col, 128))
    TILE_HW = min(tile_cap, 4096, _round_up(HW, 128))
    if TILE_HW >= HW:
        TILE_HW = HW                                       # full-extent block (always legal)
        if N == 1 and HW > 128:
            # Guarantee >=2 grid steps on a "parallel" axis so both TensorCores
            # of a v7x chip get work (harmless on single-TC v5e/v6e).
            TILE_HW = _round_up(pl.cdiv(HW, 2), 128)

    grid = (N, pl.cdiv(HW, TILE_HW))

    vmem_est = (2 * C * TILE_HW * 4                 # x double buffer (f32)
                + 2 * OUT_C * TILE_HW * out_itemsize  # out double buffer
                + fixed)
    vmem_limit = int(min(max(2 * vmem_est, 8 * 1024 * 1024), int(vmem_cap * 0.75)))

    out = pl.pallas_call(
        functools.partial(lite_raspp_kernel, matmul_dtype=matmul_dtype),
        out_shape=jax.ShapeDtypeStruct((N, OUT_C, HW), out_dtype),
        grid_spec=pltpu.PrefetchScalarGridSpec(
            num_scalar_prefetch=0,
            grid=grid,
            in_specs=[
                pl.BlockSpec((None, C, TILE_HW), lambda n, h: (n, 0, h)),
                pl.BlockSpec((None, OUT_C, C), lambda n, h: (n, 0, 0)),
                pl.BlockSpec((None, OUT_C, 1), lambda n, h: (n, 0, 0)),
            ],
            out_specs=pl.BlockSpec((None, OUT_C, TILE_HW), lambda n, h: (n, 0, h)),
        ),
        compiler_params=pltpu.CompilerParams(
            dimension_semantics=("parallel", "parallel"),
            vmem_limit_bytes=vmem_limit,
        ),
    )(x, w_gated, shift_gated)

    # (N, 128, HW) -> (N, 128, H, W): pure reshape, already NCHW, no transpose.
    return out.reshape(N, OUT_C, H, W)


def lite_raspp_reference(x_nchw, w1, bn_gamma, bn_beta, bn_mean, bn_var, w2, b2, eps=1e-5):
    """Pure-JAX reference mirroring the PyTorch forward (BN in eval mode)."""
    N, C, H, W = x_nchw.shape
    # branch1: 1x1 conv -> BN -> ReLU
    b1 = jnp.einsum("nchw,oc->nohw", x_nchw, w1.reshape(OUT_C, C))
    scale = bn_gamma / jnp.sqrt(bn_var + eps)
    shift = bn_beta - bn_mean * scale
    b1 = b1 * scale[None, :, None, None] + shift[None, :, None, None]
    b1 = jnp.maximum(b1, 0.0)
    # branch2: global avg pool -> 1x1 conv (+bias) -> sigmoid
    pooled = jnp.mean(x_nchw, axis=(2, 3))                       # (N, C)
    g = pooled @ w2.reshape(OUT_C, C).T + b2                     # (N, 128)
    gate = jax.nn.sigmoid(g)[:, :, None, None]
    return b1 * gate


if __name__ == "__main__":
    key = jax.random.PRNGKey(0)
    N, C, H, W = 2, 4, 16, 16  # small shapes consistent with the module

    ks = jax.random.split(key, 8)
    x = jax.random.normal(ks[0], (N, C, H, W), dtype=jnp.float32)

    # Deterministic parameter init (shapes from nn.Module __init__)
    w1 = jax.random.normal(ks[1], (OUT_C, C, 1, 1), dtype=jnp.float32) * 0.1
    bn_gamma = 1.0 + 0.1 * jax.random.normal(ks[2], (OUT_C,), dtype=jnp.float32)
    bn_beta = 0.1 * jax.random.normal(ks[3], (OUT_C,), dtype=jnp.float32)
    bn_mean = 0.05 * jax.random.normal(ks[4], (OUT_C,), dtype=jnp.float32)
    bn_var = jnp.abs(1.0 + 0.1 * jax.random.normal(ks[5], (OUT_C,), dtype=jnp.float32))
    w2 = jax.random.normal(ks[6], (OUT_C, C, 1, 1), dtype=jnp.float32) * 0.1
    b2 = 0.1 * jax.random.normal(ks[7], (OUT_C,), dtype=jnp.float32)

    ref = lite_raspp_reference(x, w1, bn_gamma, bn_beta, bn_mean, bn_var, w2, b2)

    # bf16 matmul path (default): loosened tolerance vs. f32 reference.
    out = lite_raspp(x, w1, bn_gamma, bn_beta, bn_mean, bn_var, w2, b2)
    out = jax.block_until_ready(out)
    assert out.shape == (N, OUT_C, H, W), out.shape
    assert jnp.allclose(out, ref, atol=2e-2, rtol=2e-2), "bf16 mismatch vs reference"

    # f32 matmul path: tight-tolerance check.
    out_f32 = jax.block_until_ready(
        lite_raspp(x, w1, bn_gamma, bn_beta, bn_mean, bn_var, w2, b2,
                   matmul_dtype=jnp.float32))
    assert jnp.allclose(out_f32, ref, atol=1e-4, rtol=1e-4), "f32 mismatch vs reference"

    print("KERNEL_OK")
</pallas_src>

<mosaic_0001>
module attributes {stable_mosaic.version = 11 : i64} {
  func.func @lite_raspp_kernel(%arg0: i32, %arg1: i32, %arg2: memref<1x4x256xf32, #tpu.memory_space<vmem>>, %arg3: memref<1x128x4xbf16, #tpu.memory_space<vmem>>, %arg4: memref<1x128x1xf32, #tpu.memory_space<vmem>>, %arg5: memref<1x128x256xf32, #tpu.memory_space<vmem>>) attributes {dimension_semantics = [#tpu.dimension_semantics<parallel>, #tpu.dimension_semantics<parallel>], iteration_bounds = array<i64: 2, 1>, scalar_prefetch = 0 : i64, scratch_operands = 0 : i64, tpu.core_type = #tpu.core_type<tc>, window_params = [{transform_indices = @transform_0, window_bounds = array<i64: 1, 4, 256>}, {transform_indices = @transform_1, window_bounds = array<i64: 1, 128, 4>}, {transform_indices = @transform_2, window_bounds = array<i64: 1, 128, 1>}, {transform_indices = @transform_3, window_bounds = array<i64: 1, 128, 256>}]} {
    %c0 = arith.constant 0 : index
    %c0_0 = arith.constant 0 : index
    %c0_1 = arith.constant 0 : index
    %0 = vector.load %arg2[%c0, %c0_0, %c0_1] : memref<1x4x256xf32, #tpu.memory_space<vmem>>, vector<1x4x256xf32>
    %1 = vector.shape_cast %0 : vector<1x4x256xf32> to vector<4x256xf32>
    %2 = arith.truncf %1 : vector<4x256xf32> to vector<4x256xbf16>
    %c0_2 = arith.constant 0 : index
    %c0_3 = arith.constant 0 : index
    %c0_4 = arith.constant 0 : index
    %3 = vector.load %arg3[%c0_2, %c0_3, %c0_4] : memref<1x128x4xbf16, #tpu.memory_space<vmem>>, vector<1x128x4xbf16>
    %4 = vector.shape_cast %3 : vector<1x128x4xbf16> to vector<128x4xbf16>
    %cst = arith.constant dense<0.000000e+00> : vector<128x256xf32>
    %5 = tpu.matmul %4, %2, %cst {dimension_numbers = #tpu.dot_dimension_numbers<[1], [0], [0], [1], [0, 0, 1, 1], [], []>} : vector<128x4xbf16>, vector<4x256xbf16>, vector<128x256xf32> -> vector<128x256xf32>
    %c0_5 = arith.constant 0 : index
    %c0_6 = arith.constant 0 : index
    %c0_7 = arith.constant 0 : index
    %6 = vector.load %arg4[%c0_5, %c0_6, %c0_7] : memref<1x128x1xf32, #tpu.memory_space<vmem>>, vector<1x128x1xf32>
    %7 = vector.shape_cast %6 : vector<1x128x1xf32> to vector<128x1xf32>
    %8 = vector.broadcast %7 : vector<128x1xf32> to vector<128x256xf32>
    %9 = arith.addf %5, %8 : vector<128x256xf32>
    %cst_8 = arith.constant 0.000000e+00 : f32
    %10 = vector.broadcast %cst_8 : f32 to vector<128x256xf32>
    %11 = arith.maximumf %9, %10 : vector<128x256xf32>
    %c0_9 = arith.constant 0 : index
    %c0_10 = arith.constant 0 : index
    %c0_11 = arith.constant 0 : index
    %12 = vector.load %arg5[%c0_9, %c0_10, %c0_11] : memref<1x128x256xf32, #tpu.memory_space<vmem>>, vector<1x128x256xf32>
    %13 = vector.shape_cast %12 : vector<1x128x256xf32> to vector<128x256xf32>
    %14 = vector.shape_cast %11 : vector<128x256xf32> to vector<1x128x256xf32>
    tpu.vector_store %arg5[%c0_9, %c0_10, %c0_11], %14 {strides = array<i32>} : memref<1x128x256xf32, #tpu.memory_space<vmem>>, vector<1x128x256xf32>,
    return
  }
  func.func @transform_0(%arg0: i32, %arg1: i32) -> (i32, i32, i32) {
    %c0_i32 = arith.constant 0 : i32
    %c0_i32_0 = arith.constant 0 : i32
    return %arg0, %c0_i32, %arg1 : i32, i32, i32
  }
  func.func @transform_1(%arg0: i32, %arg1: i32) -> (i32, i32, i32) {
    %c0_i32 = arith.constant 0 : i32
    %c0_i32_0 = arith.constant 0 : i32
    %c0_i32_1 = arith.constant 0 : i32
    return %arg0, %c0_i32, %c0_i32_0 : i32, i32, i32
  }
  func.func @transform_2(%arg0: i32, %arg1: i32) -> (i32, i32, i32) {
    %c0_i32 = arith.constant 0 : i32
    %c0_i32_0 = arith.constant 0 : i32
    %c0_i32_1 = arith.constant 0 : i32
    return %arg0, %c0_i32, %c0_i32_0 : i32, i32, i32
  }
  func.func @transform_3(%arg0: i32, %arg1: i32) -> (i32, i32, i32) {
    %c0_i32 = arith.constant 0 : i32
    %c0_i32_0 = arith.constant 0 : i32
    return %arg0, %c0_i32, %arg1 : i32, i32, i32
  }
}

</mosaic_0001>

<llo_original>
// kernel: tpu_custom_call.1
$region0: #{tpu_custom_call.1}
  #allocation0 [shape = 'u32[]', space=smem, size = 0x4, offset = 0x4, fixed_abs, tag = 'smem constant byte address 0x4 - core index']
  #allocation1 [shape = 'u32[72,128]{1,0:T(1,128)}', space=vmem, size = 0x9000, scoped, tag = 'internal scratch']
  %s0 = inlined_call_operand.vmem [shape: f32[2,4,256], index: 0, kind: input, shape index: {}]
  %s1 = inlined_call_operand.vmem [shape: bf16[2,128,4], index: 1, kind: input, shape index: {}]
  %s2 = inlined_call_operand.vmem [shape: f32[2,128,1], index: 2, kind: input, shape index: {}]
  %s3 = inlined_call_operand.hbm [shape: f32[2,128,256], index: 3, kind: output, shape index: {}]
  %s4 = sld [smem:[#allocation0]]
  $region45: #{tpu_custom_call.1} parent=0
    _
  %s6 = ssub.s32 1, %s4
  %s7 = scalar_select 0, %s6, %s4
  $region1: #{tpu_custom_call.1} parent=0
    #allocation2 [shape = 'u8[262144]{0}', space=vmem, size = 0x40000, scoped, tag = 'output window, operand 0']
    #allocation3 [shape = 's32[2]{0}', space=sflag, size = 0x8, scoped, tag = 'scoped memory for tpu_custom_call.1']
    %8 = vsyncpa [#allocation3], 0
    %s9 = scalar_lea.sflag [#allocation3], 1
    %10 = vsyncpa %s9, 0
    loop: start=0, step=1, limit=4
    $region2: #{tpu_custom_call.1} parent=1 // loop_pre_header
      _
    $region3: #{tpu_custom_call.1} parent=1 // loop_header
      %s12 = sphi 0, %s16
      %p13 = scmp.ge.s32.totalorder %s12, 4
      %s19 = sphi 0, %s31
      %s20 = sphi 0, %s27
      %s21 = sphi 0, %s19
      %s22 = sphi 0, %s20
      %s23 = sphi 0, %s21
      %s24 = sphi 0, %s22
      %s36 = sphi 0, %s38
      %s39 = sphi 0, %s36
      %s40 = sphi 0, %s39
      %s56 = sphi 0, %s40
      %s62 = sphi 0, %s64
      %s65 = sphi 0, %s62
      %s66 = sphi 0, %s65
      %s82 = sphi 0, %s66
      %s88 = sphi 0, %s90
      %s91 = sphi 0, %s88
      %s92 = sphi 0, %s91
      %s108 = sphi 0, %s92
      %s116 = sphi 0, %s118
      %s119 = sphi 0, %s116
      %s120 = sphi 0, %s119
      %s136 = sphi 0, %s120
    $region4: #{tpu_custom_call.1} parent=1 // loop_header_branch
      %15 = sbr.rel (%p13) target = $region8
    $region5: #{tpu_custom_call.1} parent=1 // loop_body
      %s17 = ssub.s32 %s12, 1
      %s18 = ssub.s32 %s12, 2
      %s25 = sadd.s32 1, %s20
      %p26 = scmp.ge.s32.totalorder %s25, 1
      %s27 = scalar_select %p26, 0, %s25
      %s28 = sadd.s32 1, %s19
      %s29 = scalar_select %p26, %s28, %s19
      %p30 = scmp.ge.s32.totalorder %s29, 2
      %s31 = scalar_select %p30, 0, %s29
      %s32 = ssub.s32 %s19, %s31
      %s33 = ssub.s32 %s20, %s27
      %s34 = sor.u32 %s32, %s33
      %p35 = scmp.eq.s32.totalorder %s34, 0
      %s37 = sadd.s32 %s36, 1
      %s38 = scalar_select %p35, %s36, %s37
      %p41 = pneg %p35
      %p42 = scmp.eq.s32.totalorder %s12, 1
      %p43 = por %p41, %p42
      %p44 = scmp.ne.s32.totalorder %s36, %s39
      %p45 = scmp.eq.s32.totalorder %s12, 0
      %p46 = por %p44, %p45
      %p47 = scmp.ne.s32.totalorder %s36, %s39
      %p48 = scmp.eq.s32.totalorder %s17, 1
      %p49 = por %p47, %p48
      %p50 = scmp.ne.s32.totalorder %s39, %s40
      %p51 = scmp.eq.s32.totalorder %s17, 0
      %p52 = por %p50, %p51
      %p53 = scmp.ne.s32.totalorder %s39, %s40
      %p54 = scmp.eq.s32.totalorder %s18, 1
      %p55 = por %p53, %p54
      %p57 = scmp.ne.s32.totalorder %s40, %s56
      %p58 = scmp.eq.s32.totalorder %s18, 0
      %p59 = por %p57, %p58
      %s60 = ssub.s32 %s19, %s31
      %p61 = scmp.eq.s32.totalorder %s60, 0
      %s63 = sadd.s32 %s62, 1
      %s64 = scalar_select %p61, %s62, %s63
      %p67 = pneg %p61
      %p68 = scmp.eq.s32.totalorder %s12, 1
      %p69 = por %p67, %p68
      %p70 = scmp.ne.s32.totalorder %s62, %s65
      %p71 = scmp.eq.s32.totalorder %s12, 0
      %p72 = por %p70, %p71
      %p73 = scmp.ne.s32.totalorder %s62, %s65
      %p74 = scmp.eq.s32.totalorder %s17, 1
      %p75 = por %p73, %p74
      %p76 = scmp.ne.s32.totalorder %s65, %s66
      %p77 = scmp.eq.s32.totalorder %s17, 0
      %p78 = por %p76, %p77
      %p79 = scmp.ne.s32.totalorder %s65, %s66
      %p80 = scmp.eq.s32.totalorder %s18, 1
      %p81 = por %p79, %p80
      %p83 = scmp.ne.s32.totalorder %s66, %s82
      %p84 = scmp.eq.s32.totalorder %s18, 0
      %p85 = por %p83, %p84
      %s86 = ssub.s32 %s19, %s31
      %p87 = scmp.eq.s32.totalorder %s86, 0
      %s89 = sadd.s32 %s88, 1
      %s90 = scalar_select %p87, %s88, %s89
      %p93 = pneg %p87
      %p94 = scmp.eq.s32.totalorder %s12, 1
      %p95 = por %p93, %p94
      %p96 = scmp.ne.s32.totalorder %s88, %s91
      %p97 = scmp.eq.s32.totalorder %s12, 0
      %p98 = por %p96, %p97
      %p99 = scmp.ne.s32.totalorder %s88, %s91
      %p100 = scmp.eq.s32.totalorder %s17, 1
      %p101 = por %p99, %p100
      %p102 = scmp.ne.s32.totalorder %s91, %s92
      %p103 = scmp.eq.s32.totalorder %s17, 0
      %p104 = por %p102, %p103
      %p105 = scmp.ne.s32.totalorder %s91, %s92
      %p106 = scmp.eq.s32.totalorder %s18, 1
      %p107 = por %p105, %p106
      %p109 = scmp.ne.s32.totalorder %s92, %s108
      %p110 = scmp.eq.s32.totalorder %s18, 0
      %p111 = por %p109, %p110
      %s112 = ssub.s32 %s19, %s31
      %s113 = ssub.s32 %s20, %s27
      %s114 = sor.u32 %s112, %s113
      %p115 = scmp.eq.s32.totalorder %s114, 0
      %s117 = sadd.s32 %s116, 1
      %s118 = scalar_select %p115, %s116, %s117
      %p121 = pneg %p115
      %p122 = scmp.eq.s32.totalorder %s12, 1
      %p123 = por %p121, %p122
      %p124 = scmp.ne.s32.totalorder %s116, %s119
      %p125 = scmp.eq.s32.totalorder %s12, 0
      %p126 = por %p124, %p125
      %p127 = scmp.ne.s32.totalorder %s116, %s119
      %p128 = scmp.eq.s32.totalorder %s17, 1
      %p129 = por %p127, %p128
      %p130 = scmp.ne.s32.totalorder %s119, %s120
      %p131 = scmp.eq.s32.totalorder %s17, 0
      %p132 = por %p130, %p131
      %p133 = scmp.ne.s32.totalorder %s119, %s120
      %p134 = scmp.eq.s32.totalorder %s18, 1
      %p135 = por %p133, %p134
      %p137 = scmp.ne.s32.totalorder %s120, %s136
      %p138 = scmp.eq.s32.totalorder %s18, 0
      %p139 = por %p137, %p138
      %p140 = scmp.le.s32.totalorder 1, %s12
      %p141 = scmp.lt.s32.totalorder %s12, 3
      %p142 = pnand %p140, %p141
      %p143 = pneg %p142
      // Predicated region
      $region9: #{tpu_custom_call.1} parent=5 // pred_check
        _
      $region10: #{tpu_custom_call.1} parent=5 // pred_check_branch
        %145 = sbr.rel (%p142) target = $region12
      $region11: #{tpu_custom_call.1} parent=5 // pred_region
        %s146 = ssub.s32 %s12, 1
      $region12: #{tpu_custom_call.1} parent=5 // pred_fallthru
        _
      %p147 = scmp.lt.s32.totalorder %s12, 2
      // Predicated region
      $region13: #{tpu_custom_call.1} parent=5 // pred_check
        %p148 = pneg %p147
      $region14: #{tpu_custom_call.1} parent=5 // pred_check_branch
        %150 = sbr.rel (%p148) target = $region16
      $region15: #{tpu_custom_call.1} parent=5 // pred_region
        // Predicated region
        $region17: #{tpu_custom_call.1} parent=15 // pred_check
          %p151 = pneg %p46
        $region18: #{tpu_custom_call.1} parent=15 // pred_check_branch
          %153 = sbr.rel (%p151) target = $region20
        $region19: #{tpu_custom_call.1} parent=15 // pred_region
          %s154 = smul.u32 2, %s20
          %p155 = scmp.lt.s32.totalorder %s19, 1
          %s156 = scalar_select %p155, %s19, 1
          %p157 = scmp.lt.s32.totalorder %s154, 1
          %s158 = scalar_select %p157, %s154, 1
          %s159 = smul.addr %s156, 2
          %s160 = sadd.s32 %s158, %s159
          %s161 = smul.addr %s160, 4
          %s162 = scalar_lea.vmem %s0, %s161
          %s163 = smul.u32 2, %s20
        $region20: #{tpu_custom_call.1} parent=15 // pred_fallthru
          _
        // Predicated region
        $region21: #{tpu_custom_call.1} parent=15 // pred_check
          %p164 = pneg %p72
        $region22: #{tpu_custom_call.1} parent=15 // pred_check_branch
          %166 = sbr.rel (%p164) target = $region24
        $region23: #{tpu_custom_call.1} parent=15 // pred_region
          %p167 = scmp.lt.s32.totalorder %s19, 1
          %s168 = scalar_select %p167, %s19, 1
          %s169 = smul.addr %s168, 16
          %s170 = smul.addr %s169, 4
          %s171 = scalar_lea.vmem %s1, %s170
        $region24: #{tpu_custom_call.1} parent=15 // pred_fallthru
          _
        // Predicated region
        $region25: #{tpu_custom_call.1} parent=15 // pred_check
          %p172 = pneg %p98
        $region26: #{tpu_custom_call.1} parent=15 // pred_check_branch
          %174 = sbr.rel (%p172) target = $region28
        $region27: #{tpu_custom_call.1} parent=15 // pred_region
          %p175 = scmp.lt.s32.totalorder %s19, 1
          %s176 = scalar_select %p175, %s19, 1
          %s177 = smul.addr %s176, 16
          %s178 = smul.addr %s177, 8
          %s179 = scalar_lea.vmem %s2, %s178
        $region28: #{tpu_custom_call.1} parent=15 // pred_fallthru
          _
      $region16: #{tpu_custom_call.1} parent=5 // pred_fallthru
        _
      %p180 = scmp.le.s32.totalorder 1, %s12
      %p181 = scmp.lt.s32.totalorder %s12, 3
      %p182 = pnand %p180, %p181
      %p183 = pneg %p182
      // Predicated region
      $region29: #{tpu_custom_call.1} parent=5 // pred_check
        _
      $region30: #{tpu_custom_call.1} parent=5 // pred_check_branch
        %185 = sbr.rel (%p182) target = $region32
      $region31: #{tpu_custom_call.1} parent=5 // pred_region
        %s186 = ssub.s32 %s12, 1
        %s187 = smul.u32 2, %s22
        %p188 = scmp.lt.s32.totalorder %s21, 1
        %s189 = scalar_select %p188, %s21, 1
        %p190 = scmp.lt.s32.totalorder %s187, 1
        %s191 = scalar_select %p190, %s187, 1
        %s192 = smul.addr %s189, 2
        %s193 = sadd.s32 %s191, %s192
        %s194 = smul.addr %s193, 4
        %s195 = scalar_lea.vmem %s0, %s194
        %p196 = pneg %p52
        %p197 = pneg %p49
        %p198 = scmp.lt.s32.totalorder %s21, 1
        %s199 = scalar_select %p198, %s21, 1
        %s200 = smul.addr %s199, 16
        %s201 = smul.addr %s200, 4
        %s202 = scalar_lea.vmem %s1, %s201
        %p203 = pneg %p78
        %p204 = pneg %p75
        %p205 = scmp.lt.s32.totalorder %s21, 1
        %s206 = scalar_select %p205, %s21, 1
        %s207 = smul.addr %s206, 16
        %s208 = smul.addr %s207, 8
        %s209 = scalar_lea.vmem %s2, %s208
        %p210 = pneg %p104
        %p211 = pneg %p101
        %p212 = pneg %p132
        %p213 = pneg %p129
        %s214 = sand.u32 %s119, 1
        %s215 = scalar_lea.sflag [#allocation3], %s214
        %s216 = sand.u32 %s119, 1
        %s217 = smul.addr %s216, 256
        %s218 = scalar_lea.vmem [#allocation2], %s217
        %s219 = smul.u32 2, %s22
        %p220 = scmp.lt.s32.totalorder %s21, 1
        %s221 = scalar_select %p220, %s21, 1
        %p222 = scmp.lt.s32.totalorder %s219, 1
        %s223 = scalar_select %p222, %s219, 1
        %s224 = smul.addr %s221, 2
        %s225 = sadd.s32 %s223, %s224
        %s226 = smul.addr %s225, 4
        %s227 = scalar_lea.vmem %s0, %s226
        %s228 = smul.u32 2, %s22
        %p229 = scmp.lt.s32.totalorder %s21, 1
        %s230 = scalar_select %p229, %s21, 1
        %s231 = smul.addr %s230, 16
        %s232 = smul.addr %s231, 4
        %s233 = scalar_lea.vmem %s1, %s232
        %p234 = scmp.lt.s32.totalorder %s21, 1
        %s235 = scalar_select %p234, %s21, 1
        %s236 = smul.addr %s235, 16
        %s237 = smul.addr %s236, 8
        %s238 = scalar_lea.vmem %s2, %s237
        %s239 = smul.u32 2, %s22
        %v241 = vld [vmem:[%s227] sm:$0xff]
        %243 = vst [vmem:[#allocation1] ss:$2 sm:$0xff] %v241
        %v244 = vld.sshfl [vmem:[#allocation1] sm:$0xff pattern:$0x75316420]
        %v245 = vld.sshfl [vmem:[#allocation1 + $0x8] sm:$0xff pattern:$0x75316420]
        %v248 = vpack.c.bf16 %v244, %v244
        %v249 = vpack.c.bf16 %v245, %v245
        %v250 = vld [vmem:[%s233] sm:$0xf]
        %v251 = vld [vmem:[%s233 + $0x4] sm:$0xf]
        %v252 = vld [vmem:[%s233 + $0x8] sm:$0xf]
        %v253 = vld [vmem:[%s233 + $0xc] sm:$0xf]
        %v254 = vld [vmem:[%s233 + $0x10] sm:$0xf]
        %v255 = vld [vmem:[%s233 + $0x14] sm:$0xf]
        %v256 = vld [vmem:[%s233 + $0x18] sm:$0xf]
        %v257 = vld [vmem:[%s233 + $0x1c] sm:$0xf]
        %v258 = vld [vmem:[%s233 + $0x20] sm:$0xf]
        %v259 = vld [vmem:[%s233 + $0x24] sm:$0xf]
        %v260 = vld [vmem:[%s233 + $0x28] sm:$0xf]
        %v261 = vld [vmem:[%s233 + $0x2c] sm:$0xf]
        %v262 = vld [vmem:[%s233 + $0x30] sm:$0xf]
        %v263 = vld [vmem:[%s233 + $0x34] sm:$0xf]
        %v264 = vld [vmem:[%s233 + $0x38] sm:$0xf]
        %v265 = vld [vmem:[%s233 + $0x3c] sm:$0xf]
        %v266 = vld [vmem:[%s238] sm:$0xff]
        %v267 = vld [vmem:[%s238 + $0x8] sm:$0xff]
        %v268 = vld [vmem:[%s238 + $0x10] sm:$0xff]
        %v269 = vld [vmem:[%s238 + $0x18] sm:$0xff]
        %v270 = vld [vmem:[%s238 + $0x20] sm:$0xff]
        %v271 = vld [vmem:[%s238 + $0x28] sm:$0xff]
        %v272 = vld [vmem:[%s238 + $0x30] sm:$0xff]
        %v273 = vld [vmem:[%s238 + $0x38] sm:$0xff]
        %v274 = vld [vmem:[%s238 + $0x40] sm:$0xff]
        %v275 = vld [vmem:[%s238 + $0x48] sm:$0xff]
        %v276 = vld [vmem:[%s238 + $0x50] sm:$0xff]
        %v277 = vld [vmem:[%s238 + $0x58] sm:$0xff]
        %v278 = vld [vmem:[%s238 + $0x60] sm:$0xff]
        %v279 = vld [vmem:[%s238 + $0x68] sm:$0xff]
        %v280 = vld [vmem:[%s238 + $0x70] sm:$0xff]
        %v281 = vld [vmem:[%s238 + $0x78] sm:$0xff]
        %283 = vset.pattern.permute.xlu0 0
        %284 = vperm.xlu0 %283, %v266
        %v285 = vpop.permute.xlu0 %284
        %288 = vset.pattern.permute.xlu0 0
        %289 = vperm.xlu0 %288, %v267
        %v290 = vpop.permute.xlu0 %289
        %293 = vset.pattern.permute.xlu0 0
        %294 = vperm.xlu0 %293, %v268
        %v295 = vpop.permute.xlu0 %294
        %298 = vset.pattern.permute.xlu0 0
        %299 = vperm.xlu0 %298, %v269
        %v300 = vpop.permute.xlu0 %299
        %303 = vset.pattern.permute.xlu0 0
        %304 = vperm.xlu0 %303, %v270
        %v305 = vpop.permute.xlu0 %304
        %308 = vset.pattern.permute.xlu0 0
        %309 = vperm.xlu0 %308, %v271
        %v310 = vpop.permute.xlu0 %309
        %313 = vset.pattern.permute.xlu0 0
        %314 = vperm.xlu0 %313, %v272
        %v315 = vpop.permute.xlu0 %314
        %318 = vset.pattern.permute.xlu0 0
        %319 = vperm.xlu0 %318, %v273
        %v320 = vpop.permute.xlu0 %319
        %323 = vset.pattern.permute.xlu0 0
        %324 = vperm.xlu0 %323, %v274
        %v325 = vpop.permute.xlu0 %324
        %328 = vset.pattern.permute.xlu0 0
        %329 = vperm.xlu0 %328, %v275
        %v330 = vpop.permute.xlu0 %329
        %333 = vset.pattern.permute.xlu0 0
        %334 = vperm.xlu0 %333, %v276
        %v335 = vpop.permute.xlu0 %334
        %338 = vset.pattern.permute.xlu0 0
        %339 = vperm.xlu0 %338, %v277
        %v340 = vpop.permute.xlu0 %339
        %343 = vset.pattern.permute.xlu0 0
        %344 = vperm.xlu0 %343, %v278
        %v345 = vpop.permute.xlu0 %344
        %348 = vset.pattern.permute.xlu0 0
        %349 = vperm.xlu0 %348, %v279
        %v350 = vpop.permute.xlu0 %349
        %353 = vset.pattern.permute.xlu0 0
        %354 = vperm.xlu0 %353, %v280
        %v355 = vpop.permute.xlu0 %354
        %358 = vset.pattern.permute.xlu0 0
        %359 = vperm.xlu0 %358, %v281
        %v360 = vpop.permute.xlu0 %359
        %v378 = vunpack.c.l.b16 %v250
        %v379 = vunpack.c.l.b16 %v251
        %v380 = vunpack.c.l.b16 %v252
        %v381 = vunpack.c.l.b16 %v253
        %v382 = vunpack.c.l.b16 %v254
        %v383 = vunpack.c.l.b16 %v255
        %v384 = vunpack.c.l.b16 %v256
        %v385 = vunpack.c.l.b16 %v257
        %v386 = vunpack.c.l.b16 %v258
        %v387 = vunpack.c.l.b16 %v259
        %v388 = vunpack.c.l.b16 %v260
        %v389 = vunpack.c.l.b16 %v261
        %v390 = vunpack.c.l.b16 %v262
        %v391 = vunpack.c.l.b16 %v263
        %v392 = vunpack.c.l.b16 %v264
        %v393 = vunpack.c.l.b16 %v265
        %v394 = vpack.c.b16 %v379, %v378
        %v395 = vpack.c.b16 %v381, %v380
        %v396 = vpack.c.b16 %v383, %v382
        %v397 = vpack.c.b16 %v385, %v384
        %v398 = vpack.c.b16 %v387, %v386
        %v399 = vpack.c.b16 %v389, %v388
        %v400 = vpack.c.b16 %v391, %v390
        %v401 = vpack.c.b16 %v393, %v392
        %vm402 = vcmask 31744
        %v404 = vsel %vm402, %v394, 0
        %v407 = vsel %vm402, %v395, 0
        %v410 = vsel %vm402, %v396, 0
        %v413 = vsel %vm402, %v397, 0
        %v416 = vsel %vm402, %v398, 0
        %v419 = vsel %vm402, %v399, 0
        %v422 = vsel %vm402, %v400, 0
        %v425 = vsel %vm402, %v401, 0
        %vm427 = vcmask 1041408
        %v429 = vsel %vm427, %v248, 0
        %v432 = vsel %vm427, %v249, 0
        %434 = vmatpush.bf16.msra.mxu0 0
        %435 = vmatpush.bf16.msra.mxu0 0
        %436 = vmatpush.bf16.msra.mxu0 0
        %437 = vmatpush.bf16.msra.mxu0 0
        %438 = vmatpush.bf16.msra.mxu0 0
        %439 = vmatpush.bf16.msra.mxu0 0
        %440 = vmatpush.bf16.msra.mxu0 0
        %441 = vmatpush.bf16.msra.mxu0 %v429
        %442 = vmatmul.bf16.gmra.mxu0 %v404
        %v443 = vpop.f32.mrf.mxu0
        %v444 = vadd.f32 %v285, %v443
        %v445 = vpop.f32.mrf.mxu0
        %v446 = vadd.f32 %v290, %v445
        %447 = vmatmul.bf16.gmra.mxu0 %v407
        %v448 = vpop.f32.mrf.mxu0
        %v449 = vadd.f32 %v295, %v448
        %v450 = vpop.f32.mrf.mxu0
        %v451 = vadd.f32 %v300, %v450
        %452 = vmatmul.bf16.gmra.mxu0 %v410
        %v453 = vpop.f32.mrf.mxu0
        %v454 = vadd.f32 %v305, %v453
        %v455 = vpop.f32.mrf.mxu0
        %v456 = vadd.f32 %v310, %v455
        %457 = vmatmul.bf16.gmra.mxu0 %v413
        %v458 = vpop.f32.mrf.mxu0
        %v459 = vadd.f32 %v315, %v458
        %v460 = vpop.f32.mrf.mxu0
        %v461 = vadd.f32 %v320, %v460
        %462 = vmatmul.bf16.gmra.mxu0 %v416
        %v463 = vpop.f32.mrf.mxu0
        %v464 = vadd.f32 %v325, %v463
        %v465 = vpop.f32.mrf.mxu0
        %v466 = vadd.f32 %v330, %v465
        %467 = vmatmul.bf16.gmra.mxu0 %v419
        %v468 = vpop.f32.mrf.mxu0
        %v469 = vadd.f32 %v335, %v468
        %v470 = vpop.f32.mrf.mxu0
        %v471 = vadd.f32 %v340, %v470
        %472 = vmatmul.bf16.gmra.mxu0 %v422
        %v473 = vpop.f32.mrf.mxu0
        %v474 = vadd.f32 %v345, %v473
        %v475 = vpop.f32.mrf.mxu0
        %v476 = vadd.f32 %v350, %v475
        %477 = vmatmul.bf16.gmra.mxu0 %v425
        %v478 = vpop.f32.mrf.mxu0
        %v479 = vadd.f32 %v355, %v478
        %v480 = vpop.f32.mrf.mxu0
        %v481 = vadd.f32 %v360, %v480
        %482 = vdwg.mxu0
        %483 = vmatpush.bf16.msra.mxu0 0
        %484 = vmatpush.bf16.msra.mxu0 0
        %485 = vmatpush.bf16.msra.mxu0 0
        %486 = vmatpush.bf16.msra.mxu0 0
        %487 = vmatpush.bf16.msra.mxu0 0
        %488 = vmatpush.bf16.msra.mxu0 0
        %489 = vmatpush.bf16.msra.mxu0 0
        %490 = vmatpush.bf16.msra.mxu0 %v432
        %491 = vmatmul.bf16.gmra.mxu0 %v404
        %v492 = vpop.f32.mrf.mxu0
        %v493 = vadd.f32 %v285, %v492
        %v494 = vpop.f32.mrf.mxu0
        %v495 = vadd.f32 %v290, %v494
        %496 = vmatmul.bf16.gmra.mxu0 %v407
        %v497 = vpop.f32.mrf.mxu0
        %v498 = vadd.f32 %v295, %v497
        %v499 = vpop.f32.mrf.mxu0
        %v500 = vadd.f32 %v300, %v499
        %501 = vmatmul.bf16.gmra.mxu0 %v410
        %v502 = vpop.f32.mrf.mxu0
        %v503 = vadd.f32 %v305, %v502
        %v504 = vpop.f32.mrf.mxu0
        %v505 = vadd.f32 %v310, %v504
        %506 = vmatmul.bf16.gmra.mxu0 %v413
        %v507 = vpop.f32.mrf.mxu0
        %v508 = vadd.f32 %v315, %v507
        %v509 = vpop.f32.mrf.mxu0
        %v510 = vadd.f32 %v320, %v509
        %511 = vmatmul.bf16.gmra.mxu0 %v416
        %v512 = vpop.f32.mrf.mxu0
        %v513 = vadd.f32 %v325, %v512
        %v514 = vpop.f32.mrf.mxu0
        %v515 = vadd.f32 %v330, %v514
        %516 = vmatmul.bf16.gmra.mxu0 %v419
        %v517 = vpop.f32.mrf.mxu0
        %v518 = vadd.f32 %v335, %v517
        %v519 = vpop.f32.mrf.mxu0
        %v520 = vadd.f32 %v340, %v519
        %521 = vmatmul.bf16.gmra.mxu0 %v422
        %v522 = vpop.f32.mrf.mxu0
        %v523 = vadd.f32 %v345, %v522
        %v524 = vpop.f32.mrf.mxu0
        %v525 = vadd.f32 %v350, %v524
        %526 = vmatmul.bf16.gmra.mxu0 %v425
        %v527 = vpop.f32.mrf.mxu0
        %v528 = vadd.f32 %v355, %v527
        %v529 = vpop.f32.mrf.mxu0
        %v530 = vadd.f32 %v360, %v529
        %531 = vdwg.mxu0
        %v532 = vmax.f32 %v444, 0.0
        %v533 = vmax.f32 %v493, 0.0
        %v534 = vmax.f32 %v446, 0.0
        %v535 = vmax.f32 %v495, 0.0
        %v536 = vmax.f32 %v449, 0.0
        %v537 = vmax.f32 %v498, 0.0
        %v538 = vmax.f32 %v451, 0.0
        %v539 = vmax.f32 %v500, 0.0
        %v540 = vmax.f32 %v454, 0.0
        %v541 = vmax.f32 %v503, 0.0
        %v542 = vmax.f32 %v456, 0.0
        %v543 = vmax.f32 %v505, 0.0
        %v544 = vmax.f32 %v459, 0.0
        %v545 = vmax.f32 %v508, 0.0
        %v546 = vmax.f32 %v461, 0.0
        %v547 = vmax.f32 %v510, 0.0
        %v548 = vmax.f32 %v464, 0.0
        %v549 = vmax.f32 %v513, 0.0
        %v550 = vmax.f32 %v466, 0.0
        %v551 = vmax.f32 %v515, 0.0
        %v552 = vmax.f32 %v469, 0.0
        %v553 = vmax.f32 %v518, 0.0
        %v554 = vmax.f32 %v471, 0.0
        %v555 = vmax.f32 %v520, 0.0
        %v556 = vmax.f32 %v474, 0.0
        %v557 = vmax.f32 %v523, 0.0
        %v558 = vmax.f32 %v476, 0.0
        %v559 = vmax.f32 %v525, 0.0
        %v560 = vmax.f32 %v479, 0.0
        %v561 = vmax.f32 %v528, 0.0
        %v562 = vmax.f32 %v481, 0.0
        %v563 = vmax.f32 %v530, 0.0
        %564 = vst [vmem:[%s218] sm:$0xff] %v532
        %565 = vst [vmem:[%s218 + $0x8] sm:$0xff] %v533
        %566 = vst [vmem:[%s218 + $0x10] sm:$0xff] %v534
        %567 = vst [vmem:[%s218 + $0x18] sm:$0xff] %v535
        %568 = vst [vmem:[%s218 + $0x20] sm:$0xff] %v536
        %569 = vst [vmem:[%s218 + $0x28] sm:$0xff] %v537
        %570 = vst [vmem:[%s218 + $0x30] sm:$0xff] %v538
        %571 = vst [vmem:[%s218 + $0x38] sm:$0xff] %v539
        %572 = vst [vmem:[%s218 + $0x40] sm:$0xff] %v540
        %573 = vst [vmem:[%s218 + $0x48] sm:$0xff] %v541
        %574 = vst [vmem:[%s218 + $0x50] sm:$0xff] %v542
        %575 = vst [vmem:[%s218 + $0x58] sm:$0xff] %v543
        %576 = vst [vmem:[%s218 + $0x60] sm:$0xff] %v544
        %577 = vst [vmem:[%s218 + $0x68] sm:$0xff] %v545
        %578 = vst [vmem:[%s218 + $0x70] sm:$0xff] %v546
        %579 = vst [vmem:[%s218 + $0x78] sm:$0xff] %v547
        %580 = vst [vmem:[%s218 + $0x80] sm:$0xff] %v548
        %581 = vst [vmem:[%s218 + $0x88] sm:$0xff] %v549
        %582 = vst [vmem:[%s218 + $0x90] sm:$0xff] %v550
        %583 = vst [vmem:[%s218 + $0x98] sm:$0xff] %v551
        %584 = vst [vmem:[%s218 + $0xa0] sm:$0xff] %v552
        %585 = vst [vmem:[%s218 + $0xa8] sm:$0xff] %v553
        %586 = vst [vmem:[%s218 + $0xb0] sm:$0xff] %v554
        %587 = vst [vmem:[%s218 + $0xb8] sm:$0xff] %v555
        %588 = vst [vmem:[%s218 + $0xc0] sm:$0xff] %v556
        %589 = vst [vmem:[%s218 + $0xc8] sm:$0xff] %v557
        %590 = vst [vmem:[%s218 + $0xd0] sm:$0xff] %v558
        %591 = vst [vmem:[%s218 + $0xd8] sm:$0xff] %v559
        %592 = vst [vmem:[%s218 + $0xe0] sm:$0xff] %v560
        %593 = vst [vmem:[%s218 + $0xe8] sm:$0xff] %v561
        %594 = vst [vmem:[%s218 + $0xf0] sm:$0xff] %v562
        %595 = vst [vmem:[%s218 + $0xf8] sm:$0xff] %v563
        %s596 = sand.u32 %s119, 1
        %s597 = scalar_lea.sflag [#allocation3], %s596
        %s598 = sand.u32 %s119, 1
        %s599 = smul.addr %s598, 256
        %s600 = scalar_lea.vmem [#allocation2], %s599
        // Predicated region
        $region33: #{tpu_custom_call.1} parent=31 // pred_check
          %p601 = pneg %p129
        $region34: #{tpu_custom_call.1} parent=31 // pred_check_branch
          %603 = sbr.rel (%p601) target = $region36
        $region35: #{tpu_custom_call.1} parent=31 // pred_region
          %s604 = smul.u32 2, %s22
          %606 = vsyncadd %s597, 0
          %s607 = smul.addr %s21, 32
          %s608 = sadd.s32 %s604, %s607
          %s609 = smul.addr %s608, 8
          %s610 = scalar_lea.hbm %s3, %s609
          %s611 = sshll.u32 %s600, 4
          %s612 = int_to_ptr.vmem [resolvable:$true] %s611
          %s613 = sshll.u32 %s610, 4
          %s614 = int_to_ptr.hbm [resolvable:$true] %s613
          %619 = dma.vmem_to_hbm [thread:$0]  %s612, 4096, %s614, %s597, 256, 256, 16
        $region36: #{tpu_custom_call.1} parent=31 // pred_fallthru
          _
      $region32: #{tpu_custom_call.1} parent=5 // pred_fallthru
        _
      %p620 = scmp.le.s32.totalorder 2, %s12
      // Predicated region
      $region37: #{tpu_custom_call.1} parent=5 // pred_check
        %p621 = pneg %p620
      $region38: #{tpu_custom_call.1} parent=5 // pred_check_branch
        %623 = sbr.rel (%p621) target = $region40
      $region39: #{tpu_custom_call.1} parent=5 // pred_region
        %s624 = ssub.s32 %s12, 2
        // Predicated region
        $region41: #{tpu_custom_call.1} parent=39 // pred_check
          %p625 = pneg %p135
        $region42: #{tpu_custom_call.1} parent=39 // pred_check_branch
          %627 = sbr.rel (%p625) target = $region44
        $region43: #{tpu_custom_call.1} parent=39 // pred_region
          %s628 = sand.u32 %s120, 1
          %s629 = scalar_lea.sflag [#allocation3], %s628
          %s630 = sand.u32 %s120, 1
          %s631 = smul.addr %s630, 256
          %s632 = scalar_lea.vmem [#allocation2], %s631
          %634 = dma.done %s629, 4096
        $region44: #{tpu_custom_call.1} parent=39 // pred_fallthru
          _
      $region40: #{tpu_custom_call.1} parent=5 // pred_fallthru
        _
    $region6: #{tpu_custom_call.1} parent=1 // loop_footer
      %s16 = sadd.s32 1, %s12
    $region7: #{tpu_custom_call.1} parent=1 // loop_footer_branch
      %11 = sbr.rel target = $region3
    $region8: #{tpu_custom_call.1} parent=1 // loop_exit
      _
    %635 = vsyncpa [#allocation3], 1
    %s636 = scalar_lea.sflag [#allocation3], 1
    %637 = vsyncpa %s636, 1

</llo_original>
